<compile_context>
chip_gen: v6e
topology: v6e:2x2x1
jax: 0.10.0
libtpu: 0.0.40
codegen_flags: <defaults>
</compile_context>

<pallas_src>
import functools

import jax
import jax.numpy as jnp
from jax.experimental import pallas as pl
from jax.experimental.pallas import tpu as pltpu

EPS = 1e-8
ENTROPY_WEIGHT = 2.0
ALPHA = 0.001
_LOG_CLAMP = -100.0  # torch.nn.BCELoss clamps log() at -100.


def _loss_kernel(a_ref, p_ref, f_ref, scal_ref, csum_ref, *, batch):
    """Accumulate per-core partial sums over one [tile_b, n] batch tile.

    scal_ref block (1, 1, 128): lane 0 = sum of -clamp(log sim, -100),
                                lane 1 = sum of -clamp(log negsim, -100)
    csum_ref block (1, 1, n)  : per-class sum of anchor probabilities
    """
    j = pl.program_id(1)
    tiles_per_core = pl.num_programs(1)
    t = pl.program_id(0) * tiles_per_core + j        # global batch-tile index

    tile_b, n = a_ref.shape

    @pl.when(j == 0)
    def _init():
        scal_ref[...] = jnp.zeros_like(scal_ref)
        csum_ref[...] = jnp.zeros_like(csum_ref)

    a = a_ref[...].astype(jnp.float32)               # [tile_b, n]
    p = p_ref[...].astype(jnp.float32)
    f = f_ref[...].astype(jnp.float32)

    # Numerically stable softmax numerators.
    e_a = jnp.exp(a - jnp.max(a, axis=-1, keepdims=True))
    e_p = jnp.exp(p - jnp.max(p, axis=-1, keepdims=True))
    e_f = jnp.exp(f - jnp.max(f, axis=-1, keepdims=True))

    sum_a = jnp.sum(e_a, axis=-1, keepdims=True)     # [tile_b, 1]
    den_p = jnp.sum(e_p, axis=-1, keepdims=True)
    den_f = jnp.sum(e_f, axis=-1, keepdims=True)
    num_p = jnp.sum(e_a * e_p, axis=-1, keepdims=True)
    num_f = jnp.sum(e_a * e_f, axis=-1, keepdims=True)

    # Fused softmax-dot (no per-element softmax divides for the neighbors).
    log_sum_a = jnp.log(sum_a)
    log_sim = jnp.log(num_p) - log_sum_a - jnp.log(den_p)
    log_negsim = jnp.log(num_f) - log_sum_a - jnp.log(den_f)

    # BCE with all-ones targets: mean(-clamp(log(x), -100)).
    nls = -jnp.maximum(log_sim, _LOG_CLAMP)           # [tile_b, 1]
    nli = -jnp.maximum(log_negsim, _LOG_CLAMP)

    # Anchor probabilities, reused for the batch-mean entropy term.
    ap = e_a * pl.reciprocal(sum_a, approx=False)     # [tile_b, n]

    lane = jax.lax.broadcasted_iota(jnp.int32, (1, scal_ref.shape[-1]), 1)

    def _accumulate(row_valid):
        if row_valid is None:
            nls_m, nli_m, ap_m = nls, nli, ap
        else:
            nls_m = jnp.where(row_valid, nls, 0.0)
            nli_m = jnp.where(row_valid, nli, 0.0)
            ap_m = jnp.where(row_valid, ap, 0.0)
        step_cons = jnp.sum(nls_m, axis=0, keepdims=True)      # (1, 1)
        step_incons = jnp.sum(nli_m, axis=0, keepdims=True)    # (1, 1)
        scal_ref[...] += jnp.where(
            lane == 0, step_cons,
            jnp.where(lane == 1, step_incons, 0.0),
        ).reshape(scal_ref.shape)
        csum_ref[...] += jnp.sum(ap_m, axis=0, keepdims=True).reshape(csum_ref.shape)

    # Only boundary tiles (ragged batch tail / redundant core-split tile)
    # pay for the iota + compare + select masking.
    tile_end = (t + 1) * tile_b

    @pl.when(tile_end <= batch)
    def _interior():
        _accumulate(None)

    @pl.when(tile_end > batch)
    def _boundary():
        row = jax.lax.broadcasted_iota(jnp.int32, (tile_b, 1), 0) + t * tile_b
        _accumulate(row < batch)


def _vmem_capacity_bytes():
    try:
        info = pltpu.get_tpu_info()
        for name in ("vmem_capacity_bytes", "vmem_bytes", "vmem_size_bytes"):
            val = getattr(info, name, None)
            if val:
                return int(val)
    except Exception:
        pass
    return 64 * 1024 * 1024  # conservative default: v7x per-TensorCore VMEM


def _num_tensorcores():
    try:
        val = int(getattr(jax.devices()[0], "num_cores", 2) or 2)
        return max(1, min(2, val))
    except Exception:
        return 2


def classification_loss(anchors, nneighbors, fneighbors, *, block_rows=None):
    """SCAN ClassificationLoss forward.

    anchors / nneighbors / fneighbors: [batch, num_classes] logits (f32 or
    bf16; bf16 halves HBM traffic and is upcast to f32 inside the kernel).
    Returns (total_loss, consistency_loss, inconsistency_loss, entropy_loss).
    """
    assert anchors.shape == nneighbors.shape == fneighbors.shape
    b, n = anchors.shape
    itemsize = jnp.dtype(anchors.dtype).itemsize

    core_split = _num_tensorcores()

    # --- Tile sizing (generation-aware). -------------------------------
    # Per batch row the kernel touches 3 inputs x 2 pipeline buffers of the
    # native dtype plus ~8 f32-sized in-kernel temporaries (e_a/e_p/e_f/ap/..)
    # that the compiler keeps in VMEM for large tiles.
    vmem_cap = _vmem_capacity_bytes()
    block_budget = max(4 << 20, min(vmem_cap // 4, 32 << 20))
    bytes_per_row = n * (3 * 2 * itemsize + 8 * 4)
    max_tile = max(128, min(8192, (block_budget // bytes_per_row) // 128 * 128))

    if block_rows is not None:
        tile_b = max(1, min(int(block_rows), b))
        if tile_b != b:
            tile_b = max(128, tile_b // 128 * 128)
    else:
        ideal = pl.cdiv(b, core_split)
        if ideal <= 128:
            tile_b = b  # tiny batch: one exact (always-legal) block
        else:
            tile_b = min(max_tile, pl.cdiv(ideal, 128) * 128)

    num_tiles = pl.cdiv(b, tile_b)
    tiles_per_core = pl.cdiv(num_tiles, core_split)

    def in_index(c, j):
        # Clamp so the (at most one) redundant tile introduced by the core
        # split re-reads the last valid tile instead of running past the end;
        # its contribution is fully masked out in-kernel.
        return (jnp.minimum(c * tiles_per_core + j, num_tiles - 1), 0)

    in_spec = pl.BlockSpec((tile_b, n), in_index)

    scal_lanes = 128  # lane-dense scalar-partials slab (lane 0/1 used)
    out_shapes = (
        jax.ShapeDtypeStruct((core_split, 1, scal_lanes), jnp.float32),
        jax.ShapeDtypeStruct((core_split, 1, n), jnp.float32),
    )
    out_specs = (
        pl.BlockSpec((1, 1, scal_lanes), lambda c, j: (c, 0, 0)),
        pl.BlockSpec((1, 1, n), lambda c, j: (c, 0, 0)),
    )

    in_block_bytes = 3 * 2 * tile_b * n * itemsize
    temp_bytes = 8 * tile_b * n * 4
    vmem_limit = int(min(vmem_cap,
                         max(32 << 20, in_block_bytes + temp_bytes + (4 << 20))))

    kernel = functools.partial(_loss_kernel, batch=b)

    scal_part, csum_part = pl.pallas_call(
        kernel,
        grid=(core_split, tiles_per_core),
        in_specs=[in_spec, in_spec, in_spec],
        out_specs=out_specs,
        out_shape=out_shapes,
        compiler_params=pltpu.CompilerParams(
            dimension_semantics=("parallel", "arbitrary"),
            vmem_limit_bytes=vmem_limit,
        ),
    )(anchors, nneighbors, fneighbors)

    # Combine the tiny per-core partials (a handful of scalar ops).
    inv_b = 1.0 / b
    cons = jnp.sum(scal_part[:, 0, 0]) * inv_b
    incons = jnp.sum(scal_part[:, 0, 1]) * inv_b
    mean_prob = jnp.sum(csum_part[:, 0, :], axis=0) * inv_b
    x_ = jnp.maximum(mean_prob, EPS)
    ent = -jnp.sum(x_ * jnp.log(x_))
    total = cons - ENTROPY_WEIGHT * ent - ALPHA * incons
    return total, cons, incons, ent


def _reference(anchors, nneighbors, fneighbors):
    ap = jax.nn.softmax(anchors.astype(jnp.float32), axis=1)
    pp = jax.nn.softmax(nneighbors.astype(jnp.float32), axis=1)
    fp = jax.nn.softmax(fneighbors.astype(jnp.float32), axis=1)
    sim = jnp.sum(ap * pp, axis=1)
    negsim = jnp.sum(ap * fp, axis=1)
    cons = jnp.mean(-jnp.maximum(jnp.log(sim), _LOG_CLAMP))
    incons = jnp.mean(-jnp.maximum(jnp.log(negsim), _LOG_CLAMP))
    mp = jnp.maximum(jnp.mean(ap, axis=0), EPS)
    ent = -jnp.sum(mp * jnp.log(mp))
    total = cons - ENTROPY_WEIGHT * ent - ALPHA * incons
    return total, cons, incons, ent


if __name__ == "__main__":
    key = jax.random.PRNGKey(0)

    # Small shape consistent with the module: [batch, num_classes].
    b, n = 8, 32
    k1, k2, k3, k4 = jax.random.split(key, 4)
    anchors = jax.random.normal(k1, (b, n), dtype=jnp.float32)
    nneighbors = jax.random.normal(k2, (b, n), dtype=jnp.float32)
    fneighbors = jax.random.normal(k3, (b, n), dtype=jnp.float32)

    out = jax.block_until_ready(
        classification_loss(anchors, nneighbors, fneighbors))
    ref = _reference(anchors, nneighbors, fneighbors)
    for got, want in zip(out, ref):
        assert jnp.allclose(got, want, rtol=1e-5, atol=1e-5), (got, want)

    # Second check: multi-tile accumulation, ragged-batch masking and the
    # 2-way core split (small block size forced for test coverage).
    b2, n2 = 600, 10
    k5, k6, k7 = jax.random.split(k4, 3)
    a2 = jax.random.normal(k5, (b2, n2), dtype=jnp.float32)
    p2 = jax.random.normal(k6, (b2, n2), dtype=jnp.float32)
    f2 = jax.random.normal(k7, (b2, n2), dtype=jnp.float32)
    out2 = jax.block_until_ready(
        classification_loss(a2, p2, f2, block_rows=128))
    ref2 = _reference(a2, p2, f2)
    for got, want in zip(out2, ref2):
        assert jnp.allclose(got, want, rtol=1e-4, atol=1e-4), (got, want)

    print("KERNEL_OK")
</pallas_src>

<mosaic_0001>
module attributes {stable_mosaic.version = 11 : i64} {
  func.func @_loss_kernel(%arg0: i32, %arg1: i32, %arg2: memref<8x32xf32, #tpu.memory_space<vmem>>, %arg3: memref<8x32xf32, #tpu.memory_space<vmem>>, %arg4: memref<8x32xf32, #tpu.memory_space<vmem>>, %arg5: memref<1x1x128xf32, #tpu.memory_space<vmem>>, %arg6: memref<1x1x32xf32, #tpu.memory_space<vmem>>) attributes {dimension_semantics = [#tpu.dimension_semantics<parallel>, #tpu.dimension_semantics<arbitrary>], iteration_bounds = array<i64: 2, 1>, scalar_prefetch = 0 : i64, scratch_operands = 0 : i64, tpu.core_type = #tpu.core_type<tc>, window_params = [{transform_indices = @transform_0, window_bounds = array<i64: 8, 32>}, {transform_indices = @transform_1, window_bounds = array<i64: 8, 32>}, {transform_indices = @transform_2, window_bounds = array<i64: 8, 32>}, {transform_indices = @transform_3, window_bounds = array<i64: 1, 1, 128>}, {transform_indices = @transform_4, window_bounds = array<i64: 1, 1, 32>}]} {
    %c1_i32 = arith.constant 1 : i32
    %0 = arith.muli %arg0, %c1_i32 : i32
    %1 = arith.addi %0, %arg1 : i32
    %c0_i32 = arith.constant 0 : i32
    %2 = arith.cmpi eq, %arg1, %c0_i32 : i32
    %3 = arith.extui %2 : i1 to i32
    %c0_i32_0 = arith.constant 0 : i32
    %4 = arith.cmpi ne, %3, %c0_i32_0 : i32
    scf.if %4 {
      %cst_22 = arith.constant 0.000000e+00 : f32
      %64 = vector.broadcast %cst_22 : f32 to vector<1x1x128xf32>
      %c0_23 = arith.constant 0 : index
      %c0_24 = arith.constant 0 : index
      %c0_25 = arith.constant 0 : index
      %65 = vector.load %arg5[%c0_23, %c0_24, %c0_25] : memref<1x1x128xf32, #tpu.memory_space<vmem>>, vector<1x1x128xf32>
      tpu.vector_store %arg5[%c0_23, %c0_24, %c0_25], %64 {strides = array<i32>} : memref<1x1x128xf32, #tpu.memory_space<vmem>>, vector<1x1x128xf32>,
      %cst_26 = arith.constant 0.000000e+00 : f32
      %66 = vector.broadcast %cst_26 : f32 to vector<1x1x32xf32>
      %c0_27 = arith.constant 0 : index
      %c0_28 = arith.constant 0 : index
      %c0_29 = arith.constant 0 : index
      %67 = vector.load %arg6[%c0_27, %c0_28, %c0_29] : memref<1x1x32xf32, #tpu.memory_space<vmem>>, vector<1x1x32xf32>
      tpu.vector_store %arg6[%c0_27, %c0_28, %c0_29], %66 {strides = array<i32>} : memref<1x1x32xf32, #tpu.memory_space<vmem>>, vector<1x1x32xf32>,
    } else {
    }
    %c0 = arith.constant 0 : index
    %c0_1 = arith.constant 0 : index
    %5 = vector.load %arg2[%c0, %c0_1] : memref<8x32xf32, #tpu.memory_space<vmem>>, vector<8x32xf32>
    %c0_2 = arith.constant 0 : index
    %c0_3 = arith.constant 0 : index
    %6 = vector.load %arg3[%c0_2, %c0_3] : memref<8x32xf32, #tpu.memory_space<vmem>>, vector<8x32xf32>
    %c0_4 = arith.constant 0 : index
    %c0_5 = arith.constant 0 : index
    %7 = vector.load %arg4[%c0_4, %c0_5] : memref<8x32xf32, #tpu.memory_space<vmem>>, vector<8x32xf32>
    %cst = arith.constant dense<0xFF800000> : vector<8xf32>
    %8 = vector.multi_reduction <maximumf>, %5, %cst [1] : vector<8x32xf32> to vector<8xf32>
    %9 = vector.shape_cast %8 : vector<8xf32> to vector<8x1xf32>
    %10 = vector.broadcast %9 : vector<8x1xf32> to vector<8x32xf32>
    %11 = arith.subf %5, %10 : vector<8x32xf32>
    %12 = math.exp %11 : vector<8x32xf32>
    %cst_6 = arith.constant dense<0xFF800000> : vector<8xf32>
    %13 = vector.multi_reduction <maximumf>, %6, %cst_6 [1] : vector<8x32xf32> to vector<8xf32>
    %14 = vector.shape_cast %13 : vector<8xf32> to vector<8x1xf32>
    %15 = vector.broadcast %14 : vector<8x1xf32> to vector<8x32xf32>
    %16 = arith.subf %6, %15 : vector<8x32xf32>
    %17 = math.exp %16 : vector<8x32xf32>
    %cst_7 = arith.constant dense<0xFF800000> : vector<8xf32>
    %18 = vector.multi_reduction <maximumf>, %7, %cst_7 [1] : vector<8x32xf32> to vector<8xf32>
    %19 = vector.shape_cast %18 : vector<8xf32> to vector<8x1xf32>
    %20 = vector.broadcast %19 : vector<8x1xf32> to vector<8x32xf32>
    %21 = arith.subf %7, %20 : vector<8x32xf32>
    %22 = math.exp %21 : vector<8x32xf32>
    %cst_8 = arith.constant dense<0.000000e+00> : vector<8xf32>
    %23 = vector.multi_reduction <add>, %12, %cst_8 [1] : vector<8x32xf32> to vector<8xf32>
    %24 = vector.shape_cast %23 : vector<8xf32> to vector<8x1xf32>
    %cst_9 = arith.constant dense<0.000000e+00> : vector<8xf32>
    %25 = vector.multi_reduction <add>, %17, %cst_9 [1] : vector<8x32xf32> to vector<8xf32>
    %26 = vector.shape_cast %25 : vector<8xf32> to vector<8x1xf32>
    %cst_10 = arith.constant dense<0.000000e+00> : vector<8xf32>
    %27 = vector.multi_reduction <add>, %22, %cst_10 [1] : vector<8x32xf32> to vector<8xf32>
    %28 = vector.shape_cast %27 : vector<8xf32> to vector<8x1xf32>
    %29 = arith.mulf %12, %17 : vector<8x32xf32>
    %cst_11 = arith.constant dense<0.000000e+00> : vector<8xf32>
    %30 = vector.multi_reduction <add>, %29, %cst_11 [1] : vector<8x32xf32> to vector<8xf32>
    %31 = vector.shape_cast %30 : vector<8xf32> to vector<8x1xf32>
    %32 = arith.mulf %12, %22 : vector<8x32xf32>
    %cst_12 = arith.constant dense<0.000000e+00> : vector<8xf32>
    %33 = vector.multi_reduction <add>, %32, %cst_12 [1] : vector<8x32xf32> to vector<8xf32>
    %34 = vector.shape_cast %33 : vector<8xf32> to vector<8x1xf32>
    %35 = math.log %24 : vector<8x1xf32>
    %36 = math.log %31 : vector<8x1xf32>
    %37 = arith.subf %36, %35 : vector<8x1xf32>
    %38 = math.log %26 : vector<8x1xf32>
    %39 = arith.subf %37, %38 : vector<8x1xf32>
    %40 = math.log %34 : vector<8x1xf32>
    %41 = arith.subf %40, %35 : vector<8x1xf32>
    %42 = math.log %28 : vector<8x1xf32>
    %43 = arith.subf %41, %42 : vector<8x1xf32>
    %cst_13 = arith.constant -1.000000e+02 : f32
    %44 = vector.broadcast %cst_13 : f32 to vector<8x1xf32>
    %45 = arith.maximumf %39, %44 : vector<8x1xf32>
    %cst_14 = arith.constant 0.000000e+00 : f32
    %46 = vector.broadcast %cst_14 : f32 to vector<8x1xf32>
    %47 = arith.subf %46, %45 : vector<8x1xf32>
    %cst_15 = arith.constant -1.000000e+02 : f32
    %48 = vector.broadcast %cst_15 : f32 to vector<8x1xf32>
    %49 = arith.maximumf %43, %48 : vector<8x1xf32>
    %cst_16 = arith.constant 0.000000e+00 : f32
    %50 = vector.broadcast %cst_16 : f32 to vector<8x1xf32>
    %51 = arith.subf %50, %49 : vector<8x1xf32>
    %52 = tpu.reciprocal %24 : vector<8x1xf32> -> vector<8x1xf32>
    %53 = vector.broadcast %52 : vector<8x1xf32> to vector<8x32xf32>
    %54 = arith.mulf %12, %53 : vector<8x32xf32>
    %55 = tpu.iota {dimensions = array<i32: 1>} : vector<1x128xi32>
    %c1_i32_17 = arith.constant 1 : i32
    %56 = arith.addi %1, %c1_i32_17 : i32
    %c8_i32 = arith.constant 8 : i32
    %57 = arith.muli %56, %c8_i32 : i32
    %c8_i32_18 = arith.constant 8 : i32
    %58 = arith.cmpi sle, %57, %c8_i32_18 : i32
    %59 = arith.extui %58 : i1 to i32
    %c0_i32_19 = arith.constant 0 : i32
    %60 = arith.cmpi ne, %59, %c0_i32_19 : i32
    scf.if %60 {
      %cst_22 = arith.constant dense<0.000000e+00> : vector<1xf32>
      %64 = vector.multi_reduction <add>, %47, %cst_22 [0] : vector<8x1xf32> to vector<1xf32>
      %65 = vector.shape_cast %64 : vector<1xf32> to vector<1x1xf32>
      %cst_23 = arith.constant dense<0.000000e+00> : vector<1xf32>
      %66 = vector.multi_reduction <add>, %51, %cst_23 [0] : vector<8x1xf32> to vector<1xf32>
      %67 = vector.shape_cast %66 : vector<1xf32> to vector<1x1xf32>
      %c0_24 = arith.constant 0 : index
      %c0_25 = arith.constant 0 : index
      %c0_26 = arith.constant 0 : index
      %68 = vector.load %arg5[%c0_24, %c0_25, %c0_26] : memref<1x1x128xf32, #tpu.memory_space<vmem>>, vector<1x1x128xf32>
      %c0_i32_27 = arith.constant 0 : i32
      %69 = vector.broadcast %c0_i32_27 : i32 to vector<1x128xi32>
      %70 = arith.cmpi eq, %55, %69 : vector<1x128xi32>
      %c1_i32_28 = arith.constant 1 : i32
      %71 = vector.broadcast %c1_i32_28 : i32 to vector<1x128xi32>
      %72 = arith.cmpi eq, %55, %71 : vector<1x128xi32>
      %cst_29 = arith.constant 0.000000e+00 : f32
      %73 = vector.shape_cast %67 : vector<1x1xf32> to vector<1x1xf32>
      %74 = vector.broadcast %73 : vector<1x1xf32> to vector<1x128xf32>
      %75 = vector.broadcast %cst_29 : f32 to vector<1x128xf32>
      %76 = arith.select %72, %74, %75 : vector<1x128xi1>, vector<1x128xf32>
      %77 = vector.shape_cast %65 : vector<1x1xf32> to vector<1x1xf32>
      %78 = vector.broadcast %77 : vector<1x1xf32> to vector<1x128xf32>
      %79 = arith.select %70, %78, %76 : vector<1x128xi1>, vector<1x128xf32>
      %80 = vector.shape_cast %79 : vector<1x128xf32> to vector<1x1x128xf32>
      %81 = arith.addf %68, %80 : vector<1x1x128xf32>
      %c0_30 = arith.constant 0 : index
      %c0_31 = arith.constant 0 : index
      %c0_32 = arith.constant 0 : index
      %82 = vector.load %arg5[%c0_30, %c0_31, %c0_32] : memref<1x1x128xf32, #tpu.memory_space<vmem>>, vector<1x1x128xf32>
      tpu.vector_store %arg5[%c0_30, %c0_31, %c0_32], %81 {strides = array<i32>} : memref<1x1x128xf32, #tpu.memory_space<vmem>>, vector<1x1x128xf32>,
      %c0_33 = arith.constant 0 : index
      %c0_34 = arith.constant 0 : index
      %c0_35 = arith.constant 0 : index
      %83 = vector.load %arg6[%c0_33, %c0_34, %c0_35] : memref<1x1x32xf32, #tpu.memory_space<vmem>>, vector<1x1x32xf32>
      %cst_36 = arith.constant dense<0.000000e+00> : vector<32xf32>
      %84 = vector.multi_reduction <add>, %54, %cst_36 [0] : vector<8x32xf32> to vector<32xf32>
      %85 = vector.shape_cast %84 : vector<32xf32> to vector<1x32xf32>
      %86 = vector.shape_cast %85 : vector<1x32xf32> to vector<1x1x32xf32>
      %87 = arith.addf %83, %86 : vector<1x1x32xf32>
      %c0_37 = arith.constant 0 : index
      %c0_38 = arith.constant 0 : index
      %c0_39 = arith.constant 0 : index
      %88 = vector.load %arg6[%c0_37, %c0_38, %c0_39] : memref<1x1x32xf32, #tpu.memory_space<vmem>>, vector<1x1x32xf32>
      tpu.vector_store %arg6[%c0_37, %c0_38, %c0_39], %87 {strides = array<i32>} : memref<1x1x32xf32, #tpu.memory_space<vmem>>, vector<1x1x32xf32>,
    } else {
    }
    %c8_i32_20 = arith.constant 8 : i32
    %61 = arith.cmpi sgt, %57, %c8_i32_20 : i32
    %62 = arith.extui %61 : i1 to i32
    %c0_i32_21 = arith.constant 0 : i32
    %63 = arith.cmpi ne, %62, %c0_i32_21 : i32
    scf.if %63 {
      %64 = tpu.iota {dimensions = array<i32: 0>} : vector<8x1xi32>
      %c8_i32_22 = arith.constant 8 : i32
      %65 = arith.muli %1, %c8_i32_22 : i32
      %66 = vector.broadcast %65 : i32 to vector<8x1xi32>
      %67 = arith.addi %64, %66 : vector<8x1xi32>
      %c8_i32_23 = arith.constant 8 : i32
      %68 = vector.broadcast %c8_i32_23 : i32 to vector<8x1xi32>
      %69 = arith.cmpi slt, %67, %68 : vector<8x1xi32>
      %cst_24 = arith.constant 0.000000e+00 : f32
      %70 = vector.broadcast %cst_24 : f32 to vector<8x1xf32>
      %71 = arith.select %69, %47, %70 : vector<8x1xi1>, vector<8x1xf32>
      %cst_25 = arith.constant 0.000000e+00 : f32
      %72 = vector.broadcast %cst_25 : f32 to vector<8x1xf32>
      %73 = arith.select %69, %51, %72 : vector<8x1xi1>, vector<8x1xf32>
      %cst_26 = arith.constant 0.000000e+00 : f32
      %74 = vector.shape_cast %69 : vector<8x1xi1> to vector<8x1xi1>
      %75 = vector.broadcast %74 : vector<8x1xi1> to vector<8x32xi1>
      %76 = vector.broadcast %cst_26 : f32 to vector<8x32xf32>
      %77 = arith.select %75, %54, %76 : vector<8x32xi1>, vector<8x32xf32>
      %cst_27 = arith.constant dense<0.000000e+00> : vector<1xf32>
      %78 = vector.multi_reduction <add>, %71, %cst_27 [0] : vector<8x1xf32> to vector<1xf32>
      %79 = vector.shape_cast %78 : vector<1xf32> to vector<1x1xf32>
      %cst_28 = arith.constant dense<0.000000e+00> : vector<1xf32>
      %80 = vector.multi_reduction <add>, %73, %cst_28 [0] : vector<8x1xf32> to vector<1xf32>
      %81 = vector.shape_cast %80 : vector<1xf32> to vector<1x1xf32>
      %c0_29 = arith.constant 0 : index
      %c0_30 = arith.constant 0 : index
      %c0_31 = arith.constant 0 : index
      %82 = vector.load %arg5[%c0_29, %c0_30, %c0_31] : memref<1x1x128xf32, #tpu.memory_space<vmem>>, vector<1x1x128xf32>
      %c0_i32_32 = arith.constant 0 : i32
      %83 = vector.broadcast %c0_i32_32 : i32 to vector<1x128xi32>
      %84 = arith.cmpi eq, %55, %83 : vector<1x128xi32>
      %c1_i32_33 = arith.constant 1 : i32
      %85 = vector.broadcast %c1_i32_33 : i32 to vector<1x128xi32>
      %86 = arith.cmpi eq, %55, %85 : vector<1x128xi32>
      %cst_34 = arith.constant 0.000000e+00 : f32
      %87 = vector.shape_cast %81 : vector<1x1xf32> to vector<1x1xf32>
      %88 = vector.broadcast %87 : vector<1x1xf32> to vector<1x128xf32>
      %89 = vector.broadcast %cst_34 : f32 to vector<1x128xf32>
      %90 = arith.select %86, %88, %89 : vector<1x128xi1>, vector<1x128xf32>
      %91 = vector.shape_cast %79 : vector<1x1xf32> to vector<1x1xf32>
      %92 = vector.broadcast %91 : vector<1x1xf32> to vector<1x128xf32>
      %93 = arith.select %84, %92, %90 : vector<1x128xi1>, vector<1x128xf32>
      %94 = vector.shape_cast %93 : vector<1x128xf32> to vector<1x1x128xf32>
      %95 = arith.addf %82, %94 : vector<1x1x128xf32>
      %c0_35 = arith.constant 0 : index
      %c0_36 = arith.constant 0 : index
      %c0_37 = arith.constant 0 : index
      %96 = vector.load %arg5[%c0_35, %c0_36, %c0_37] : memref<1x1x128xf32, #tpu.memory_space<vmem>>, vector<1x1x128xf32>
      tpu.vector_store %arg5[%c0_35, %c0_36, %c0_37], %95 {strides = array<i32>} : memref<1x1x128xf32, #tpu.memory_space<vmem>>, vector<1x1x128xf32>,
      %c0_38 = arith.constant 0 : index
      %c0_39 = arith.constant 0 : index
      %c0_40 = arith.constant 0 : index
      %97 = vector.load %arg6[%c0_38, %c0_39, %c0_40] : memref<1x1x32xf32, #tpu.memory_space<vmem>>, vector<1x1x32xf32>
      %cst_41 = arith.constant dense<0.000000e+00> : vector<32xf32>
      %98 = vector.multi_reduction <add>, %77, %cst_41 [0] : vector<8x32xf32> to vector<32xf32>
      %99 = vector.shape_cast %98 : vector<32xf32> to vector<1x32xf32>
      %100 = vector.shape_cast %99 : vector<1x32xf32> to vector<1x1x32xf32>
      %101 = arith.addf %97, %100 : vector<1x1x32xf32>
      %c0_42 = arith.constant 0 : index
      %c0_43 = arith.constant 0 : index
      %c0_44 = arith.constant 0 : index
      %102 = vector.load %arg6[%c0_42, %c0_43, %c0_44] : memref<1x1x32xf32, #tpu.memory_space<vmem>>, vector<1x1x32xf32>
      tpu.vector_store %arg6[%c0_42, %c0_43, %c0_44], %101 {strides = array<i32>} : memref<1x1x32xf32, #tpu.memory_space<vmem>>, vector<1x1x32xf32>,
    } else {
    }
    return
  }
  func.func @transform_0(%arg0: i32, %arg1: i32) -> (i32, i32) {
    %c1_i32 = arith.constant 1 : i32
    %0 = arith.muli %arg0, %c1_i32 : i32
    %1 = arith.addi %0, %arg1 : i32
    %c0_i32 = arith.constant 0 : i32
    %2 = arith.minsi %1, %c0_i32 : i32
    %c0_i32_0 = arith.constant 0 : i32
    %c0_i32_1 = arith.constant 0 : i32
    return %2, %c0_i32_0 : i32, i32
  }
  func.func @transform_1(%arg0: i32, %arg1: i32) -> (i32, i32) {
    %c1_i32 = arith.constant 1 : i32
    %0 = arith.muli %arg0, %c1_i32 : i32
    %1 = arith.addi %0, %arg1 : i32
    %c0_i32 = arith.constant 0 : i32
    %2 = arith.minsi %1, %c0_i32 : i32
    %c0_i32_0 = arith.constant 0 : i32
    %c0_i32_1 = arith.constant 0 : i32
    return %2, %c0_i32_0 : i32, i32
  }
  func.func @transform_2(%arg0: i32, %arg1: i32) -> (i32, i32) {
    %c1_i32 = arith.constant 1 : i32
    %0 = arith.muli %arg0, %c1_i32 : i32
    %1 = arith.addi %0, %arg1 : i32
    %c0_i32 = arith.constant 0 : i32
    %2 = arith.minsi %1, %c0_i32 : i32
    %c0_i32_0 = arith.constant 0 : i32
    %c0_i32_1 = arith.constant 0 : i32
    return %2, %c0_i32_0 : i32, i32
  }
  func.func @transform_3(%arg0: i32, %arg1: i32) -> (i32, i32, i32) {
    %c0_i32 = arith.constant 0 : i32
    %c0_i32_0 = arith.constant 0 : i32
    %c0_i32_1 = arith.constant 0 : i32
    return %arg0, %c0_i32, %c0_i32_0 : i32, i32, i32
  }
  func.func @transform_4(%arg0: i32, %arg1: i32) -> (i32, i32, i32) {
    %c0_i32 = arith.constant 0 : i32
    %c0_i32_0 = arith.constant 0 : i32
    %c0_i32_1 = arith.constant 0 : i32
    return %arg0, %c0_i32, %c0_i32_0 : i32, i32, i32
  }
}

</mosaic_0001>

<llo_original>
// kernel: tpu_custom_call.1
$region0: #{tpu_custom_call.1}
  #allocation0 [shape = 'u32[]', space=smem, size = 0x4, offset = 0x4, fixed_abs, tag = 'smem constant byte address 0x4 - core index']
  #allocation1 [shape = 'u32[144,128]{1,0:T(1,128)}', space=vmem, size = 0x12000, scoped, tag = 'internal scratch']
  %s0 = inlined_call_operand.hbm [shape: f32[8,32], index: 0, kind: input, shape index: {}]
  %s1 = inlined_call_operand.hbm [shape: f32[8,32], index: 1, kind: input, shape index: {}]
  %s2 = inlined_call_operand.hbm [shape: f32[8,32], index: 2, kind: input, shape index: {}]
  %s3 = inlined_call_operand.hbm [shape: f32[2,1,128], index: 3, kind: output, shape index: {0}]
  %s4 = inlined_call_operand.hbm [shape: f32[2,1,32], index: 4, kind: output, shape index: {1}]
  %5 = xla_tuple %s3, %s4
  %s6 = sld [smem:[#allocation0]]
  $region77: #{tpu_custom_call.1} parent=0
    _
  %s8 = ssub.s32 1, %s6
  %s9 = scalar_select 0, %s8, %s6
  $region1: #{tpu_custom_call.1} parent=0
    #allocation2 [shape = 'u8[8192]{0}', space=vmem, size = 0x2000, scoped, tag = 'input window, operand 0']
    #allocation3 [shape = 's32[2]{0}', space=sflag, size = 0x8, scoped, tag = 'scoped memory for tpu_custom_call.1']
    #allocation4 [shape = 's32[2]{0}', space=sflag, size = 0x8, scoped, tag = 'scoped memory for tpu_custom_call.1']
    #allocation5 [shape = 'u8[8192]{0}', space=vmem, size = 0x2000, scoped, tag = 'input window, operand 1']
    #allocation6 [shape = 's32[2]{0}', space=sflag, size = 0x8, scoped, tag = 'scoped memory for tpu_custom_call.1']
    #allocation7 [shape = 'u8[8192]{0}', space=vmem, size = 0x2000, scoped, tag = 'input window, operand 2']
    #allocation8 [shape = 'u8[1024]{0}', space=vmem, size = 0x400, scoped, tag = 'output window, operand 0']
    #allocation9 [shape = 'u8[1024]{0}', space=vmem, size = 0x400, scoped, tag = 'output window, operand 1']
    #allocation10 [shape = 's32[2]{0}', space=sflag, size = 0x8, scoped, tag = 'scoped memory for tpu_custom_call.1']
    %10 = vsyncpa [#allocation3], 0
    %s11 = scalar_lea.sflag [#allocation3], 1
    %12 = vsyncpa %s11, 0
    %13 = vsyncpa [#allocation6], 0
    %s14 = scalar_lea.sflag [#allocation6], 1
    %15 = vsyncpa %s14, 0
    %16 = vsyncpa [#allocation4], 0
    %s17 = scalar_lea.sflag [#allocation4], 1
    %18 = vsyncpa %s17, 0
    %19 = vsyncpa [#allocation10], 0
    %s20 = scalar_lea.sflag [#allocation10], 1
    %21 = vsyncpa %s20, 0
    loop: start=0, step=1, limit=4
    $region2: #{tpu_custom_call.1} parent=1 // loop_pre_header
      _
    $region3: #{tpu_custom_call.1} parent=1 // loop_header
      %s23 = sphi 0, %s27
      %p24 = scmp.ge.s32.totalorder %s23, 4
      %s30 = sphi 0, %s42
      %s31 = sphi 0, %s38
      %s32 = sphi 0, %s30
      %s33 = sphi 0, %s31
      %s34 = sphi 0, %s32
      %s35 = sphi 0, %s33
      %s51 = sphi 0, %s53
      %s54 = sphi 0, %s51
      %s55 = sphi 0, %s54
      %s71 = sphi 0, %s55
      %s83 = sphi 0, %s85
      %s86 = sphi 0, %s83
      %s87 = sphi 0, %s86
      %s103 = sphi 0, %s87
      %s115 = sphi 0, %s117
      %s118 = sphi 0, %s115
      %s119 = sphi 0, %s118
      %s135 = sphi 0, %s119
      %s141 = sphi 0, %s143
      %s144 = sphi 0, %s141
      %s145 = sphi 0, %s144
      %s161 = sphi 0, %s145
      %s167 = sphi 0, %s169
      %s170 = sphi 0, %s167
      %s171 = sphi 0, %s170
      %s187 = sphi 0, %s171
    $region4: #{tpu_custom_call.1} parent=1 // loop_header_branch
      %26 = sbr.rel (%p24) target = $region8
    $region5: #{tpu_custom_call.1} parent=1 // loop_body
      %s28 = ssub.s32 %s23, 1
      %s29 = ssub.s32 %s23, 2
      %s36 = sadd.s32 1, %s31
      %p37 = scmp.ge.s32.totalorder %s36, 1
      %s38 = scalar_select %p37, 0, %s36
      %s39 = sadd.s32 1, %s30
      %s40 = scalar_select %p37, %s39, %s30
      %p41 = scmp.ge.s32.totalorder %s40, 2
      %s42 = scalar_select %p41, 0, %s40
      %s43 = sadd.s32 %s30, %s31
      %p44 = scmp.lt.s32.totalorder %s43, 0
      %s45 = scalar_select %p44, %s43, 0
      %s46 = sadd.s32 %s42, %s38
      %p47 = scmp.lt.s32.totalorder %s46, 0
      %s48 = scalar_select %p47, %s46, 0
      %s49 = ssub.s32 %s45, %s48
      %p50 = scmp.eq.s32.totalorder %s49, 0
      %s52 = sadd.s32 %s51, 1
      %s53 = scalar_select %p50, %s51, %s52
      %p56 = pneg %p50
      %p57 = scmp.eq.s32.totalorder %s23, 1
      %p58 = por %p56, %p57
      %p59 = scmp.ne.s32.totalorder %s51, %s54
      %p60 = scmp.eq.s32.totalorder %s23, 0
      %p61 = por %p59, %p60
      %p62 = scmp.ne.s32.totalorder %s51, %s54
      %p63 = scmp.eq.s32.totalorder %s28, 1
      %p64 = por %p62, %p63
      %p65 = scmp.ne.s32.totalorder %s54, %s55
      %p66 = scmp.eq.s32.totalorder %s28, 0
      %p67 = por %p65, %p66
      %p68 = scmp.ne.s32.totalorder %s54, %s55
      %p69 = scmp.eq.s32.totalorder %s29, 1
      %p70 = por %p68, %p69
      %p72 = scmp.ne.s32.totalorder %s55, %s71
      %p73 = scmp.eq.s32.totalorder %s29, 0
      %p74 = por %p72, %p73
      %s75 = sadd.s32 %s30, %s31
      %p76 = scmp.lt.s32.totalorder %s75, 0
      %s77 = scalar_select %p76, %s75, 0
      %s78 = sadd.s32 %s42, %s38
      %p79 = scmp.lt.s32.totalorder %s78, 0
      %s80 = scalar_select %p79, %s78, 0
      %s81 = ssub.s32 %s77, %s80
      %p82 = scmp.eq.s32.totalorder %s81, 0
      %s84 = sadd.s32 %s83, 1
      %s85 = scalar_select %p82, %s83, %s84
      %p88 = pneg %p82
      %p89 = scmp.eq.s32.totalorder %s23, 1
      %p90 = por %p88, %p89
      %p91 = scmp.ne.s32.totalorder %s83, %s86
      %p92 = scmp.eq.s32.totalorder %s23, 0
      %p93 = por %p91, %p92
      %p94 = scmp.ne.s32.totalorder %s83, %s86
      %p95 = scmp.eq.s32.totalorder %s28, 1
      %p96 = por %p94, %p95
      %p97 = scmp.ne.s32.totalorder %s86, %s87
      %p98 = scmp.eq.s32.totalorder %s28, 0
      %p99 = por %p97, %p98
      %p100 = scmp.ne.s32.totalorder %s86, %s87
      %p101 = scmp.eq.s32.totalorder %s29, 1
      %p102 = por %p100, %p101
      %p104 = scmp.ne.s32.totalorder %s87, %s103
      %p105 = scmp.eq.s32.totalorder %s29, 0
      %p106 = por %p104, %p105
      %s107 = sadd.s32 %s30, %s31
      %p108 = scmp.lt.s32.totalorder %s107, 0
      %s109 = scalar_select %p108, %s107, 0
      %s110 = sadd.s32 %s42, %s38
      %p111 = scmp.lt.s32.totalorder %s110, 0
      %s112 = scalar_select %p111, %s110, 0
      %s113 = ssub.s32 %s109, %s112
      %p114 = scmp.eq.s32.totalorder %s113, 0
      %s116 = sadd.s32 %s115, 1
      %s117 = scalar_select %p114, %s115, %s116
      %p120 = pneg %p114
      %p121 = scmp.eq.s32.totalorder %s23, 1
      %p122 = por %p120, %p121
      %p123 = scmp.ne.s32.totalorder %s115, %s118
      %p124 = scmp.eq.s32.totalorder %s23, 0
      %p125 = por %p123, %p124
      %p126 = scmp.ne.s32.totalorder %s115, %s118
      %p127 = scmp.eq.s32.totalorder %s28, 1
      %p128 = por %p126, %p127
      %p129 = scmp.ne.s32.totalorder %s118, %s119
      %p130 = scmp.eq.s32.totalorder %s28, 0
      %p131 = por %p129, %p130
      %p132 = scmp.ne.s32.totalorder %s118, %s119
      %p133 = scmp.eq.s32.totalorder %s29, 1
      %p134 = por %p132, %p133
      %p136 = scmp.ne.s32.totalorder %s119, %s135
      %p137 = scmp.eq.s32.totalorder %s29, 0
      %p138 = por %p136, %p137
      %s139 = ssub.s32 %s30, %s42
      %p140 = scmp.eq.s32.totalorder %s139, 0
      %s142 = sadd.s32 %s141, 1
      %s143 = scalar_select %p140, %s141, %s142
      %p146 = pneg %p140
      %p147 = scmp.eq.s32.totalorder %s23, 1
      %p148 = por %p146, %p147
      %p149 = scmp.ne.s32.totalorder %s141, %s144
      %p150 = scmp.eq.s32.totalorder %s23, 0
      %p151 = por %p149, %p150
      %p152 = scmp.ne.s32.totalorder %s141, %s144
      %p153 = scmp.eq.s32.totalorder %s28, 1
      %p154 = por %p152, %p153
      %p155 = scmp.ne.s32.totalorder %s144, %s145
      %p156 = scmp.eq.s32.totalorder %s28, 0
      %p157 = por %p155, %p156
      %p158 = scmp.ne.s32.totalorder %s144, %s145
      %p159 = scmp.eq.s32.totalorder %s29, 1
      %p160 = por %p158, %p159
      %p162 = scmp.ne.s32.totalorder %s145, %s161
      %p163 = scmp.eq.s32.totalorder %s29, 0
      %p164 = por %p162, %p163
      %s165 = ssub.s32 %s30, %s42
      %p166 = scmp.eq.s32.totalorder %s165, 0
      %s168 = sadd.s32 %s167, 1
      %s169 = scalar_select %p166, %s167, %s168
      %p172 = pneg %p166
      %p173 = scmp.eq.s32.totalorder %s23, 1
      %p174 = por %p172, %p173
      %p175 = scmp.ne.s32.totalorder %s167, %s170
      %p176 = scmp.eq.s32.totalorder %s23, 0
      %p177 = por %p175, %p176
      %p178 = scmp.ne.s32.totalorder %s167, %s170
      %p179 = scmp.eq.s32.totalorder %s28, 1
      %p180 = por %p178, %p179
      %p181 = scmp.ne.s32.totalorder %s170, %s171
      %p182 = scmp.eq.s32.totalorder %s28, 0
      %p183 = por %p181, %p182
      %p184 = scmp.ne.s32.totalorder %s170, %s171
      %p185 = scmp.eq.s32.totalorder %s29, 1
      %p186 = por %p184, %p185
      %p188 = scmp.ne.s32.totalorder %s171, %s187
      %p189 = scmp.eq.s32.totalorder %s29, 0
      %p190 = por %p188, %p189
      %p191 = scmp.le.s32.totalorder 1, %s23
      %p192 = scmp.lt.s32.totalorder %s23, 3
      %p193 = pnand %p191, %p192
      %p194 = pneg %p193
      // Predicated region
      $region9: #{tpu_custom_call.1} parent=5 // pred_check
        _
      $region10: #{tpu_custom_call.1} parent=5 // pred_check_branch
        %196 = sbr.rel (%p193) target = $region12
      $region11: #{tpu_custom_call.1} parent=5 // pred_region
        %s197 = ssub.s32 %s23, 1
      $region12: #{tpu_custom_call.1} parent=5 // pred_fallthru
        _
      %p198 = scmp.lt.s32.totalorder %s23, 2
      // Predicated region
      $region13: #{tpu_custom_call.1} parent=5 // pred_check
        %p199 = pneg %p198
      $region14: #{tpu_custom_call.1} parent=5 // pred_check_branch
        %201 = sbr.rel (%p199) target = $region16
      $region15: #{tpu_custom_call.1} parent=5 // pred_region
        // Predicated region
        $region17: #{tpu_custom_call.1} parent=15 // pred_check
          %p202 = pneg %p61
        $region18: #{tpu_custom_call.1} parent=15 // pred_check_branch
          %204 = sbr.rel (%p202) target = $region20
        $region19: #{tpu_custom_call.1} parent=15 // pred_region
          %s205 = sand.u32 %s51, 1
          %s206 = scalar_lea.sflag [#allocation3], %s205
          %s207 = sand.u32 %s51, 1
          %s208 = smul.addr %s207, 8
          %s209 = scalar_lea.vmem [#allocation2], %s208
          %s210 = sadd.s32 %s30, %s31
          %p211 = scmp.lt.s32.totalorder %s210, 0
          %s212 = scalar_select %p211, %s210, 0
          %s214 = ssub.s32 128, 128
          %215 = vsyncadd %s206, %s214
          %s216 = smul.addr %s212, 128
          %s217 = scalar_lea.hbm %s0, %s216
          %s219 = sshll.u32 %s209, 4
          %s220 = int_to_ptr.vmem [resolvable:$true] %s219
          %222 = dma.hbm_to_vmem [thread:$0]  %s217, 128, %s220, %s206
        $region20: #{tpu_custom_call.1} parent=15 // pred_fallthru
          _
        // Predicated region
        $region21: #{tpu_custom_call.1} parent=15 // pred_check
          %p223 = pneg %p93
        $region22: #{tpu_custom_call.1} parent=15 // pred_check_branch
          %225 = sbr.rel (%p223) target = $region24
        $region23: #{tpu_custom_call.1} parent=15 // pred_region
          %s226 = sand.u32 %s23, 1
          %s227 = scalar_lea.sflag [#allocation6], %s226
          %s228 = sand.u32 %s83, 1
          %s229 = smul.addr %s228, 8
          %s230 = scalar_lea.vmem [#allocation5], %s229
          %s231 = sadd.s32 %s30, %s31
          %p232 = scmp.lt.s32.totalorder %s231, 0
          %s233 = scalar_select %p232, %s231, 0
          %s235 = ssub.s32 128, 128
          %236 = vsyncadd %s227, %s235
          %s237 = smul.addr %s233, 128
          %s238 = scalar_lea.hbm %s1, %s237
          %s240 = sshll.u32 %s230, 4
          %s241 = int_to_ptr.vmem [resolvable:$true] %s240
          %243 = dma.hbm_to_vmem [thread:$0]  %s238, 128, %s241, %s227
        $region24: #{tpu_custom_call.1} parent=15 // pred_fallthru
          _
        // Predicated region
        $region25: #{tpu_custom_call.1} parent=15 // pred_check
          %p244 = pneg %p125
        $region26: #{tpu_custom_call.1} parent=15 // pred_check_branch
          %246 = sbr.rel (%p244) target = $region28
        $region27: #{tpu_custom_call.1} parent=15 // pred_region
          %s247 = sand.u32 %s23, 1
          %s248 = scalar_lea.sflag [#allocation6], %s247
          %s249 = sand.u32 %s115, 1
          %s250 = smul.addr %s249, 8
          %s251 = scalar_lea.vmem [#allocation7], %s250
          %s252 = sadd.s32 %s30, %s31
          %p253 = scmp.lt.s32.totalorder %s252, 0
          %s254 = scalar_select %p253, %s252, 0
          %s256 = ssub.s32 128, 128
          %257 = vsyncadd %s248, %s256
          %s258 = smul.addr %s254, 128
          %s259 = scalar_lea.hbm %s2, %s258
          %s261 = sshll.u32 %s251, 4
          %s262 = int_to_ptr.vmem [resolvable:$true] %s261
          %264 = dma.hbm_to_vmem [thread:$0]  %s259, 128, %s262, %s248
        $region28: #{tpu_custom_call.1} parent=15 // pred_fallthru
          _
      $region16: #{tpu_custom_call.1} parent=5 // pred_fallthru
        _
      %p265 = scmp.le.s32.totalorder 1, %s23
      %p266 = scmp.lt.s32.totalorder %s23, 3
      %p267 = pnand %p265, %p266
      %p268 = pneg %p267
      // Predicated region
      $region29: #{tpu_custom_call.1} parent=5 // pred_check
        _
      $region30: #{tpu_custom_call.1} parent=5 // pred_check_branch
        %270 = sbr.rel (%p267) target = $region32
      $region31: #{tpu_custom_call.1} parent=5 // pred_region
        %s271 = ssub.s32 %s23, 1
        %s272 = sand.u32 %s54, 1
        %s273 = scalar_lea.sflag [#allocation3], %s272
        %s274 = sand.u32 %s54, 1
        %s275 = smul.addr %s274, 8
        %s276 = scalar_lea.vmem [#allocation2], %s275
        // Predicated region
        $region33: #{tpu_custom_call.1} parent=31 // pred_check
          %p277 = pneg %p67
        $region34: #{tpu_custom_call.1} parent=31 // pred_check_branch
          %279 = sbr.rel (%p277) target = $region36
        $region35: #{tpu_custom_call.1} parent=31 // pred_region
          %280 = dma.done %s273, 128
        $region36: #{tpu_custom_call.1} parent=31 // pred_fallthru
          _
        %s281 = sand.u32 %s28, 1
        %s282 = scalar_lea.sflag [#allocation6], %s281
        %s283 = sand.u32 %s86, 1
        %s284 = smul.addr %s283, 8
        %s285 = scalar_lea.vmem [#allocation5], %s284
        // Predicated region
        $region37: #{tpu_custom_call.1} parent=31 // pred_check
          %p286 = pneg %p99
        $region38: #{tpu_custom_call.1} parent=31 // pred_check_branch
          %288 = sbr.rel (%p286) target = $region40
        $region39: #{tpu_custom_call.1} parent=31 // pred_region
          %289 = dma.done %s282, 128
        $region40: #{tpu_custom_call.1} parent=31 // pred_fallthru
          _
        %s290 = sand.u32 %s28, 1
        %s291 = scalar_lea.sflag [#allocation6], %s290
        %s292 = sand.u32 %s118, 1
        %s293 = smul.addr %s292, 8
        %s294 = scalar_lea.vmem [#allocation7], %s293
        // Predicated region
        $region41: #{tpu_custom_call.1} parent=31 // pred_check
          %p295 = pneg %p131
        $region42: #{tpu_custom_call.1} parent=31 // pred_check_branch
          %297 = sbr.rel (%p295) target = $region44
        $region43: #{tpu_custom_call.1} parent=31 // pred_region
          %298 = dma.done %s291, 128
        $region44: #{tpu_custom_call.1} parent=31 // pred_fallthru
          _
        %s299 = sand.u32 %s54, 1
        %s300 = scalar_lea.sflag [#allocation3], %s299
        %s301 = sand.u32 %s54, 1
        %s302 = smul.addr %s301, 8
        %s303 = scalar_lea.vmem [#allocation2], %s302
        %p304 = pneg %p67
        %p305 = pneg %p64
        %s306 = sand.u32 %s28, 1
        %s307 = scalar_lea.sflag [#allocation6], %s306
        %s308 = sand.u32 %s86, 1
        %s309 = smul.addr %s308, 8
        %s310 = scalar_lea.vmem [#allocation5], %s309
        %p311 = pneg %p99
        %p312 = pneg %p96
        %s313 = sand.u32 %s28, 1
        %s314 = scalar_lea.sflag [#allocation6], %s313
        %s315 = sand.u32 %s118, 1
        %s316 = smul.addr %s315, 8
        %s317 = scalar_lea.vmem [#allocation7], %s316
        %p318 = pneg %p131
        %p319 = pneg %p128
        %p320 = pneg %p157
        %p321 = pneg %p154
        %s322 = sand.u32 %s144, 1
        %s323 = scalar_lea.sflag [#allocation4], %s322
        %s324 = sand.u32 %s144, 1
        %s325 = scalar_lea.vmem [#allocation8], %s324
        %p326 = pneg %p183
        %p327 = pneg %p180
        %s328 = sand.u32 %s170, 1
        %s329 = scalar_lea.sflag [#allocation10], %s328
        %s330 = sand.u32 %s170, 1
        %s331 = scalar_lea.vmem [#allocation9], %s330
        %s332 = sadd.s32 %s32, %s33
        %p333 = scmp.lt.s32.totalorder %s332, 0
        %s334 = scalar_select %p333, %s332, 0
        %s335 = sadd.s32 %s32, %s33
        %p336 = scmp.lt.s32.totalorder %s335, 0
        %s337 = scalar_select %p336, %s335, 0
        %s338 = sadd.s32 %s32, %s33
        %p339 = scmp.lt.s32.totalorder %s338, 0
        %s340 = scalar_select %p339, %s338, 0
        %s341 = sadd.s32 %s32, %s33
        %p342 = scmp.eq.s32.totalorder %s33, 0
        // Predicated region
        $region45: #{tpu_custom_call.1} parent=31 // pred_check
          %p343 = pneg %p342
        $region46: #{tpu_custom_call.1} parent=31 // pred_check_branch
          %345 = sbr.rel (%p343) target = $region48
        $region47: #{tpu_custom_call.1} parent=31 // pred_region
          %346 = vst [vmem:[%s325] sm:$0x1] 0.0
          %vm347 = vcmask 253952
          %348 = vst.msk [vmem:[%s331] sm:$0x1] %vm347, 0.0
        $region48: #{tpu_custom_call.1} parent=31 // pred_fallthru
          _
        %v349 = vld [vmem:[%s276] sm:$0xff]
        %v350 = vld [vmem:[%s285] sm:$0xff]
        %v351 = vld [vmem:[%s294] sm:$0xff]
        %vm352 = vcmask 261120
        %v353 = vsel %vm352, %v349, -inf
        %354 = vmax.xlane.f32.xlu0 %v353
        %v355 = vpop.xlane.xlu0 %354
        %v356 = vsub.f32 %v349, %v355
        %v357 = vmul.f32 %v356, 1.442695
        %v358 = vpow.pop %v357
        %v359 = vsel %vm352, %v350, -inf
        %360 = vmax.xlane.f32.xlu0 %v359
        %v361 = vpop.xlane.xlu0 %360
        %v362 = vsub.f32 %v350, %v361
        %v363 = vmul.f32 %v362, 1.442695
        %v364 = vpow.pop %v363
        %v365 = vsel %vm352, %v351, -inf
        %366 = vmax.xlane.f32.xlu0 %v365
        %v367 = vpop.xlane.xlu0 %366
        %v368 = vsub.f32 %v351, %v367
        %v369 = vmul.f32 %v368, 1.442695
        %v370 = vpow.pop %v369
        %v371 = vsel %vm352, %v358, 0.0
        %372 = vadd.xlane.f32.xlu0 %v371
        %v373 = vpop.xlane.xlu0 %372
        %v374 = vsel %vm352, %v364, 0.0
        %375 = vadd.xlane.f32.xlu0 %v374
        %v376 = vpop.xlane.xlu0 %375
        %v377 = vsel %vm352, %v370, 0.0
        %378 = vadd.xlane.f32.xlu0 %v377
        %v379 = vpop.xlane.xlu0 %378
        %v380 = vmul.f32 %v358, %v364
        %v381 = vsel %vm352, %v380, 0.0
        %382 = vadd.xlane.f32.xlu0 %v381
        %v383 = vpop.xlane.xlu0 %382
        %v384 = vmul.f32 %v358, %v370
        %v385 = vsel %vm352, %v384, 0.0
        %386 = vadd.xlane.f32.xlu0 %v385
        %v387 = vpop.xlane.xlu0 %386
        %v388 = vlog2.pop %v373
        %v389 = vmul.f32 %v388, 0.6931472
        %v390 = vlog2.pop %v383
        %v391 = vmul.f32 %v390, 0.6931472
        %v392 = vsub.f32 %v391, %v389
        %v393 = vlog2.pop %v376
        %v394 = vmul.f32 %v393, 0.6931472
        %v395 = vsub.f32 %v392, %v394
        %v396 = vlog2.pop %v387
        %v397 = vmul.f32 %v396, 0.6931472
        %v398 = vsub.f32 %v397, %v389
        %v399 = vlog2.pop %v379
        %v400 = vmul.f32 %v399, 0.6931472
        %v401 = vsub.f32 %v398, %v400
        %v402 = vmax.f32 %v395, -100.0
        %v403 = vsub.f32 0.0, %v402
        %v404 = vmax.f32 %v401, -100.0
        %v405 = vsub.f32 0.0, %v404
        %v406 = vrcp.pop %v373
        %v407 = vmul.f32 %v358, %v406
        %v408 = vlaneseq
        %v409 = vand.u32 %v408, 127
        %s410 = sadd.s32 %s341, 1
        %s411 = smul.u32 %s410, 8
        %p412 = scmp.le.s32.totalorder %s411, 8
        // Predicated region
        $region49: #{tpu_custom_call.1} parent=31 // pred_check
          %p413 = pneg %p412
        $region50: #{tpu_custom_call.1} parent=31 // pred_check_branch
          %415 = sbr.rel (%p413) target = $region52
        $region51: #{tpu_custom_call.1} parent=31 // pred_region
          %v416 = vrot.slane %v403, 4
          %v417 = vadd.f32 %v403, %v416
          %v418 = vrot.slane %v417, 2
          %v419 = vadd.f32 %v417, %v418
          %v420 = vrot.slane %v419, 1
          %v421 = vadd.f32 %v419, %v420
          %v422 = vrot.slane %v405, 4
          %v423 = vadd.f32 %v405, %v422
          %v424 = vrot.slane %v423, 2
          %v425 = vadd.f32 %v423, %v424
          %v426 = vrot.slane %v425, 1
          %v427 = vadd.f32 %v425, %v426
          %v428 = vld [vmem:[%s325] sm:$0x1]
          %vm429 = vcmp.eq.s32.totalorder %v409, 0
          %vm430 = vcmp.eq.s32.totalorder %v409, 1
          %v431 = vsel %vm430, %v427, 0.0
          %v432 = vsel %vm429, %v421, %v431
          %v433 = vadd.f32 %v428, %v432
          %434 = vst [vmem:[%s325] sm:$0x1] %v433
          %v435 = vld [vmem:[%s331] sm:$0x1]
          %v436 = vsel %vm352, %v407, 0.0
          %v437 = vrot.slane %v436, 4
          %v438 = vadd.f32 %v436, %v437
          %v439 = vrot.slane %v438, 2
          %v440 = vadd.f32 %v438, %v439
          %v441 = vrot.slane %v440, 1
          %v442 = vadd.f32 %v440, %v441
          %v443 = vadd.f32 %v435, %v442
          %vm444 = vcmask 253952
          %445 = vst.msk [vmem:[%s331] sm:$0x1] %vm444, %v443
        $region52: #{tpu_custom_call.1} parent=31 // pred_fallthru
          _
        %p446 = scmp.gt.s32.totalorder %s411, 8
        // Predicated region
        $region53: #{tpu_custom_call.1} parent=31 // pred_check
          %p447 = pneg %p446
        $region54: #{tpu_custom_call.1} parent=31 // pred_check_branch
          %449 = sbr.rel (%p447) target = $region56
        $region55: #{tpu_custom_call.1} parent=31 // pred_region
          %v450 = vlaneseq
          %v451 = vshrl.u32 %v450, 7
          %s452 = smul.u32 %s341, 8
          %v453 = vstv %s452
          %v454 = vadd.s32 %v451, %v453
          %vm455 = vcmp.lt.s32.totalorder %v454, 8
          %v456 = vsel %vm455, %v403, 0.0
          %v457 = vsel %vm455, %v405, 0.0
          %v458 = vsel %vm455, 1, 0
          %vm459 = vcmp.eq.s32.totalorder %v458, 1
          %v460 = vsel %vm459, %v407, 0.0
          %v461 = vrot.slane %v456, 4
          %v462 = vadd.f32 %v456, %v461
          %v463 = vrot.slane %v462, 2
          %v464 = vadd.f32 %v462, %v463
          %v465 = vrot.slane %v464, 1
          %v466 = vadd.f32 %v464, %v465
          %v467 = vrot.slane %v457, 4
          %v468 = vadd.f32 %v457, %v467
          %v469 = vrot.slane %v468, 2
          %v470 = vadd.f32 %v468, %v469
          %v471 = vrot.slane %v470, 1
          %v472 = vadd.f32 %v470, %v471
          %v473 = vld [vmem:[%s325] sm:$0x1]
          %vm474 = vcmp.eq.s32.totalorder %v409, 0
          %vm475 = vcmp.eq.s32.totalorder %v409, 1
          %v476 = vsel %vm475, %v472, 0.0
          %v477 = vsel %vm474, %v466, %v476
          %v478 = vadd.f32 %v473, %v477
          %479 = vst [vmem:[%s325] sm:$0x1] %v478
          %v480 = vld [vmem:[%s331] sm:$0x1]
          %v481 = vsel %vm352, %v460, 0.0
          %v482 = vrot.slane %v481, 4
          %v483 = vadd.f32 %v481, %v482
          %v484 = vrot.slane %v483, 2
          %v485 = vadd.f32 %v483, %v484
          %v486 = vrot.slane %v485, 1
          %v487 = vadd.f32 %v485, %v486
          %v488 = vadd.f32 %v480, %v487
          %vm489 = vcmask 253952
          %490 = vst.msk [vmem:[%s331] sm:$0x1] %vm489, %v488
        $region56: #{tpu_custom_call.1} parent=31 // pred_fallthru
          _
        %s491 = sand.u32 %s144, 1
        %s492 = scalar_lea.sflag [#allocation4], %s491
        %s493 = sand.u32 %s144, 1
        %s494 = scalar_lea.vmem [#allocation8], %s493
        %s495 = sand.u32 %s170, 1
        %s496 = scalar_lea.sflag [#allocation10], %s495
        %s497 = sand.u32 %s170, 1
        %s498 = scalar_lea.vmem [#allocation9], %s497
        // Predicated region
        $region57: #{tpu_custom_call.1} parent=31 // pred_check
          %p499 = pneg %p154
        $region58: #{tpu_custom_call.1} parent=31 // pred_check_branch
          %501 = sbr.rel (%p499) target = $region60
        $region59: #{tpu_custom_call.1} parent=31 // pred_region
          %s503 = ssub.s32 16, 16
          %504 = vsyncadd %s492, %s503
          %s505 = smul.addr %s32, 16
          %s506 = scalar_lea.hbm %s3, %s505
          %s508 = sshll.u32 %s494, 4
          %s509 = int_to_ptr.vmem [resolvable:$true] %s508
          %511 = dma.vmem_to_hbm [thread:$0]  %s509, 16, %s506, %s492
        $region60: #{tpu_custom_call.1} parent=31 // pred_fallthru
          _
        // Predicated region
        $region61: #{tpu_custom_call.1} parent=31 // pred_check
          %p512 = pneg %p180
        $region62: #{tpu_custom_call.1} parent=31 // pred_check_branch
          %514 = sbr.rel (%p512) target = $region64
        $region63: #{tpu_custom_call.1} parent=31 // pred_region
          %s516 = ssub.s32 16, 16
          %517 = vsyncadd %s496, %s516
          %s518 = smul.addr %s32, 16
          %s519 = scalar_lea.hbm %s4, %s518
          %s521 = sshll.u32 %s498, 4
          %s522 = int_to_ptr.vmem [resolvable:$true] %s521
          %524 = dma.vmem_to_hbm [thread:$0]  %s522, 16, %s519, %s496
        $region64: #{tpu_custom_call.1} parent=31 // pred_fallthru
          _
      $region32: #{tpu_custom_call.1} parent=5 // pred_fallthru
        _
      %p525 = scmp.le.s32.totalorder 2, %s23
      // Predicated region
      $region65: #{tpu_custom_call.1} parent=5 // pred_check
        %p526 = pneg %p525
      $region66: #{tpu_custom_call.1} parent=5 // pred_check_branch
        %528 = sbr.rel (%p526) target = $region68
      $region67: #{tpu_custom_call.1} parent=5 // pred_region
        %s529 = ssub.s32 %s23, 2
        // Predicated region
        $region69: #{tpu_custom_call.1} parent=67 // pred_check
          %p530 = pneg %p160
        $region70: #{tpu_custom_call.1} parent=67 // pred_check_branch
          %532 = sbr.rel (%p530) target = $region72
        $region71: #{tpu_custom_call.1} parent=67 // pred_region
          %s533 = sand.u32 %s145, 1
          %s534 = scalar_lea.sflag [#allocation4], %s533
          %s535 = sand.u32 %s145, 1
          %s536 = scalar_lea.vmem [#allocation8], %s535
          %537 = dma.done %s534, 16
        $region72: #{tpu_custom_call.1} parent=67 // pred_fallthru
          _
        // Predicated region
        $region73: #{tpu_custom_call.1} parent=67 // pred_check
          %p538 = pneg %p186
        $region74: #{tpu_custom_call.1} parent=67 // pred_check_branch
          %540 = sbr.rel (%p538) target = $region76
        $region75: #{tpu_custom_call.1} parent=67 // pred_region
          %s541 = sand.u32 %s171, 1
          %s542 = scalar_lea.sflag [#allocation10], %s541
          %s543 = sand.u32 %s171, 1
          %s544 = scalar_lea.vmem [#allocation9], %s543
          %545 = dma.done %s542, 16
        $region76: #{tpu_custom_call.1} parent=67 // pred_fallthru
          _
      $region68: #{tpu_custom_call.1} parent=5 // pred_fallthru
        _
    $region6: #{tpu_custom_call.1} parent=1 // loop_footer
      %s27 = sadd.s32 1, %s23
    $region7: #{tpu_custom_call.1} parent=1 // loop_footer_branch
      %22 = sbr.rel target = $region3
    $region8: #{tpu_custom_call.1} parent=1 // loop_exit
      _
    %546 = vsyncpa [#allocation3], 1
    %s547 = scalar_lea.sflag [#allocation3], 1
    %548 = vsyncpa %s547, 1
    %549 = vsyncpa [#allocation6], 1
    %s550 = scalar_lea.sflag [#allocation6], 1
    %551 = vsyncpa %s550, 1
    %552 = vsyncpa [#allocation4], 1
    %s553 = scalar_lea.sflag [#allocation4], 1
    %554 = vsyncpa %s553, 1
    %555 = vsyncpa [#allocation10], 1
    %s556 = scalar_lea.sflag [#allocation10], 1
    %557 = vsyncpa %s556, 1

</llo_original>
